<compile_context>
chip_gen: v7x
topology: tpu7x:2x2x1
jax: 0.10.0
libtpu: 0.0.40
codegen_flags: <defaults>
</compile_context>

<pallas_src>
import functools
import math

import jax
import jax.numpy as jnp
from jax import lax
from jax.experimental import pallas as pl
from jax.experimental.pallas import tpu as pltpu

_MASK_NEG = -1e30  # finite "minus infinity": masked keys vanish after softmax, no NaNs.


def _flash_attn_kernel(q_ref, k_ref, v_ref, bias_ref, o_ref,
                       m_scr, l_scr, acc_scr):
    """One grid step = (batch b, head h, query tile qi, kv tile ki)."""
    ki = pl.program_id(3)

    # --- first kv step of a query tile: init online-softmax statistics ---
    @pl.when(ki == 0)
    def _init():
        m_scr[...] = jnp.full(m_scr.shape, _MASK_NEG, dtype=jnp.float32)
        l_scr[...] = jnp.zeros(l_scr.shape, dtype=jnp.float32)
        acc_scr[...] = jnp.zeros(acc_scr.shape, dtype=jnp.float32)

    q = q_ref[0, 0]        # (q_tile, d_k)  bf16; 1/sqrt(d_k) already folded into W_q
    k = k_ref[0, 0]        # (kv_tile, d_k) bf16
    v = v_ref[0, 0]        # (kv_tile, d_k) bf16
    bias = bias_ref[0]     # (1, kv_tile)   f32 additive key-padding bias

    # Contract the shared last (d_k) axes: Q(q,d) x K(k,d) -> (q,k); no explicit K^T.
    s = lax.dot_general(q, k, (((1,), (1,)), ((), ())),
                        preferred_element_type=jnp.float32)   # (q_tile, kv_tile) f32
    s = s + bias

    # Online softmax update (all stats in f32 — required on v5e, cheap elsewhere).
    m_prev = m_scr[...]
    m_new = jnp.maximum(m_prev, jnp.max(s, axis=-1, keepdims=True))
    alpha = jnp.exp(m_prev - m_new)
    p = jnp.exp(s - m_new)
    l_scr[...] = alpha * l_scr[...] + jnp.sum(p, axis=-1, keepdims=True)
    acc_scr[...] = alpha * acc_scr[...] + jnp.dot(
        p.astype(jnp.bfloat16), v, preferred_element_type=jnp.float32)
    m_scr[...] = m_new

    # --- last kv step: normalize (exact reciprocal, once per q tile) and store ---
    @pl.when(ki == pl.num_programs(3) - 1)
    def _finalize():
        o_ref[0, 0] = (acc_scr[...] / l_scr[...]).astype(o_ref.dtype)


def scaled_dot_product_attention(x, wq_t, wk_t, wv_t, mask, *, n_heads,
                                 q_tile=None, kv_tile=None):
    """Encoder self-attention with key-padding mask.

    x:     (batch, seq_L, d_model) f32
    w*_t:  (d_model, d_model) pre-transposed Linear weights (y = x @ W.T semantics)
    mask:  (batch, seq_L) — 0 marks a padded key position
    returns (batch, seq_L, d_model) f32
    """
    batch, seq_L, d_model = x.shape
    assert d_model % n_heads == 0
    d_k = d_model // n_heads
    scale = 1.0 / math.sqrt(d_k)

    # --- one-time projections in XLA: bf16 operands, bf16 outputs, scale folded in ---
    x_bf = x.astype(jnp.bfloat16)
    wq_b = (wq_t * scale).astype(jnp.bfloat16)
    wk_b = wk_t.astype(jnp.bfloat16)
    wv_b = wv_t.astype(jnp.bfloat16)
    q = jnp.dot(x_bf, wq_b, preferred_element_type=jnp.bfloat16)
    k = jnp.dot(x_bf, wk_b, preferred_element_type=jnp.bfloat16)
    v = jnp.dot(x_bf, wv_b, preferred_element_type=jnp.bfloat16)

    # Head-major layout (batch, n_heads, seq_L, d_k): per-head blocks start at lane 0.
    def to_heads(t):
        return t.reshape(batch, seq_L, n_heads, d_k).transpose(0, 2, 1, 3)

    qh, kh, vh = to_heads(q), to_heads(k), to_heads(v)

    # Additive key-padding bias: 0 where valid, large-negative where padded.
    bias = jnp.where(mask.reshape(batch, 1, seq_L) == 0, _MASK_NEG, 0.0).astype(jnp.float32)

    # Flash tiling along the sequence (tiles must divide seq_L).  Defaults suit
    # v5e/v7x; on v6e (128 MiB VMEM) q_tile=512 / kv_tile=1024 amortize per-step
    # overhead further when seq_L allows.
    if q_tile is None:
        q_tile = min(seq_L, 256)
    if kv_tile is None:
        kv_tile = min(seq_L, 512)
    assert seq_L % q_tile == 0 and seq_L % kv_tile == 0

    grid = (batch, n_heads, seq_L // q_tile, seq_L // kv_tile)

    # Advisory cost for the pallas_call only (projections run outside it).
    attn_flops = 4 * batch * seq_L * seq_L * d_model          # QK^T + PV
    transcendentals = batch * n_heads * seq_L * seq_L         # exp(s - m)
    bytes_accessed = (3 * batch * seq_L * d_model * 2         # bf16 q, k, v reads
                      + batch * seq_L * d_model * 4           # f32 output
                      + batch * seq_L * 4)                    # bias
    cost = pl.CostEstimate(flops=attn_flops,
                           transcendentals=transcendentals,
                           bytes_accessed=bytes_accessed)

    out_heads = pl.pallas_call(
        _flash_attn_kernel,
        out_shape=jax.ShapeDtypeStruct((batch, n_heads, seq_L, d_k), jnp.float32),
        grid=grid,
        in_specs=[
            pl.BlockSpec((1, 1, q_tile, d_k), lambda b, h, qi, ki: (b, h, qi, 0)),
            pl.BlockSpec((1, 1, kv_tile, d_k), lambda b, h, qi, ki: (b, h, ki, 0)),
            pl.BlockSpec((1, 1, kv_tile, d_k), lambda b, h, qi, ki: (b, h, ki, 0)),
            pl.BlockSpec((1, 1, kv_tile), lambda b, h, qi, ki: (b, 0, ki)),
        ],
        out_specs=pl.BlockSpec((1, 1, q_tile, d_k), lambda b, h, qi, ki: (b, h, qi, 0)),
        scratch_shapes=[
            pltpu.VMEM((q_tile, 1), jnp.float32),    # running max
            pltpu.VMEM((q_tile, 1), jnp.float32),    # running sum
            pltpu.VMEM((q_tile, d_k), jnp.float32),  # output accumulator
        ],
        compiler_params=pltpu.CompilerParams(
            dimension_semantics=("parallel", "parallel", "parallel", "arbitrary"),
        ),
        cost_estimate=cost,
    )(qh, kh, vh, bias)

    # Merge heads back: (B, H, S, d_k) -> (B, S, d_model) — cheap XLA transpose.
    return out_heads.transpose(0, 2, 1, 3).reshape(batch, seq_L, d_model)


def _reference(x, wq_t, wk_t, wv_t, mask, n_heads):
    """Pure-JAX f32 replica of the PyTorch forward (encoder path, pad mask)."""
    batch, seq_L, d_model = x.shape
    d_k = d_model // n_heads
    q = x @ wq_t
    k = x @ wk_t
    v = x @ wv_t
    qh = q.reshape(batch, seq_L, n_heads, d_k).transpose(0, 2, 1, 3)
    kh = k.reshape(batch, seq_L, n_heads, d_k).transpose(0, 2, 1, 3)
    vh = v.reshape(batch, seq_L, n_heads, d_k).transpose(0, 2, 1, 3)
    attn = jnp.einsum("bhqd,bhkd->bhqk", qh, kh) / math.sqrt(d_k)
    pad = (mask == 0).reshape(batch, 1, 1, seq_L)
    attn = jnp.where(pad, -jnp.inf, attn)
    scores = jax.nn.softmax(attn, axis=-1)
    out = jnp.einsum("bhqk,bhkd->bhqd", scores, vh)
    return out.transpose(0, 2, 1, 3).reshape(batch, seq_L, d_model)


if __name__ == "__main__":
    # config: d_model=32, n_heads=4, batch=2, seq_L=8
    batch, seq_L, d_model, n_heads = 2, 8, 32, 4

    key = jax.random.PRNGKey(0)
    kx, kq, kk, kv = jax.random.split(key, 4)

    x = jax.random.normal(kx, (batch, seq_L, d_model), dtype=jnp.float32)

    # Deterministic Linear weights; PyTorch stores W as (out, in), we pass W.T.
    bound = 1.0 / math.sqrt(d_model)
    wq = jax.random.uniform(kq, (d_model, d_model), jnp.float32, -bound, bound)
    wk = jax.random.uniform(kk, (d_model, d_model), jnp.float32, -bound, bound)
    wv = jax.random.uniform(kv, (d_model, d_model), jnp.float32, -bound, bound)
    wq_t, wk_t, wv_t = wq.T, wk.T, wv.T

    # Padding mask (1 = valid token, 0 = pad); each row keeps >=1 valid key.
    # Note: fully-masked rows would be finite (not NaN) in the kernel, unlike the
    # reference softmax over all -inf — documented semantic difference.
    mask = jnp.array(
        [[1, 1, 1, 1, 1, 1, 0, 0],
         [1, 1, 1, 1, 0, 0, 0, 0]], dtype=jnp.float32)

    out = scaled_dot_product_attention(x, wq_t, wk_t, wv_t, mask, n_heads=n_heads)
    out = jax.block_until_ready(out)

    ref = _reference(x, wq_t, wk_t, wv_t, mask, n_heads)
    assert out.shape == (batch, seq_L, d_model)
    # Tolerance relaxed vs. the pure-f32 reference: projections and attention use
    # bf16 MXU operands (f32 accumulation in the attention kernel).
    max_err = float(jnp.max(jnp.abs(out - ref)))
    assert jnp.allclose(out, ref, atol=3e-2, rtol=3e-2), f"mismatch vs reference (max abs err {max_err})"

    print("KERNEL_OK")
</pallas_src>

<mosaic_0001>
module attributes {stable_mosaic.version = 11 : i64} {
  func.func @_flash_attn_kernel(%arg0: i32, %arg1: i32, %arg2: i32, %arg3: i32, %arg4: memref<1x1x8x8xbf16, #tpu.memory_space<vmem>>, %arg5: memref<1x1x8x8xbf16, #tpu.memory_space<vmem>>, %arg6: memref<1x1x8x8xbf16, #tpu.memory_space<vmem>>, %arg7: memref<1x1x8xf32, #tpu.memory_space<vmem>>, %arg8: memref<1x1x8x8xf32, #tpu.memory_space<vmem>>, %arg9: memref<8x1xf32, #tpu.memory_space<vmem>>, %arg10: memref<8x1xf32, #tpu.memory_space<vmem>>, %arg11: memref<8x8xf32, #tpu.memory_space<vmem>>) attributes {dimension_semantics = [#tpu.dimension_semantics<parallel>, #tpu.dimension_semantics<parallel>, #tpu.dimension_semantics<parallel>, #tpu.dimension_semantics<arbitrary>], iteration_bounds = array<i64: 2, 4, 1, 1>, scalar_prefetch = 0 : i64, scratch_operands = 3 : i64, tpu.core_type = #tpu.core_type<tc>, window_params = [{transform_indices = @transform_0, window_bounds = array<i64: 1, 1, 8, 8>}, {transform_indices = @transform_1, window_bounds = array<i64: 1, 1, 8, 8>}, {transform_indices = @transform_2, window_bounds = array<i64: 1, 1, 8, 8>}, {transform_indices = @transform_3, window_bounds = array<i64: 1, 1, 8>}, {transform_indices = @transform_4, window_bounds = array<i64: 1, 1, 8, 8>}]} {
    %c0_i32 = arith.constant 0 : i32
    %0 = arith.cmpi eq, %arg3, %c0_i32 : i32
    %1 = arith.extui %0 : i1 to i32
    %c0_i32_0 = arith.constant 0 : i32
    %2 = arith.cmpi ne, %1, %c0_i32_0 : i32
    scf.if %2 {
      %cst_32 = arith.constant -1.000000e+30 : f32
      %40 = vector.broadcast %cst_32 : f32 to vector<8x1xf32>
      %c0_33 = arith.constant 0 : index
      %c0_34 = arith.constant 0 : index
      %41 = vector.load %arg9[%c0_33, %c0_34] : memref<8x1xf32, #tpu.memory_space<vmem>>, vector<8x1xf32>
      tpu.vector_store %arg9[%c0_33, %c0_34], %40 {strides = array<i32>} : memref<8x1xf32, #tpu.memory_space<vmem>>, vector<8x1xf32>,
      %cst_35 = arith.constant 0.000000e+00 : f32
      %42 = vector.broadcast %cst_35 : f32 to vector<8x1xf32>
      %c0_36 = arith.constant 0 : index
      %c0_37 = arith.constant 0 : index
      %43 = vector.load %arg10[%c0_36, %c0_37] : memref<8x1xf32, #tpu.memory_space<vmem>>, vector<8x1xf32>
      tpu.vector_store %arg10[%c0_36, %c0_37], %42 {strides = array<i32>} : memref<8x1xf32, #tpu.memory_space<vmem>>, vector<8x1xf32>,
      %cst_38 = arith.constant 0.000000e+00 : f32
      %44 = vector.broadcast %cst_38 : f32 to vector<8x8xf32>
      %c0_39 = arith.constant 0 : index
      %c0_40 = arith.constant 0 : index
      %45 = vector.load %arg11[%c0_39, %c0_40] : memref<8x8xf32, #tpu.memory_space<vmem>>, vector<8x8xf32>
      tpu.vector_store %arg11[%c0_39, %c0_40], %44 {strides = array<i32>} : memref<8x8xf32, #tpu.memory_space<vmem>>, vector<8x8xf32>,
    } else {
    }
    %c0 = arith.constant 0 : index
    %c0_1 = arith.constant 0 : index
    %c0_2 = arith.constant 0 : index
    %c0_3 = arith.constant 0 : index
    %3 = vector.load %arg4[%c0, %c0_1, %c0_2, %c0_3] : memref<1x1x8x8xbf16, #tpu.memory_space<vmem>>, vector<1x1x8x8xbf16>
    %4 = vector.shape_cast %3 : vector<1x1x8x8xbf16> to vector<8x8xbf16>
    %c0_4 = arith.constant 0 : index
    %c0_5 = arith.constant 0 : index
    %c0_6 = arith.constant 0 : index
    %c0_7 = arith.constant 0 : index
    %5 = vector.load %arg5[%c0_4, %c0_5, %c0_6, %c0_7] : memref<1x1x8x8xbf16, #tpu.memory_space<vmem>>, vector<1x1x8x8xbf16>
    %6 = vector.shape_cast %5 : vector<1x1x8x8xbf16> to vector<8x8xbf16>
    %c0_8 = arith.constant 0 : index
    %c0_9 = arith.constant 0 : index
    %c0_10 = arith.constant 0 : index
    %c0_11 = arith.constant 0 : index
    %7 = vector.load %arg6[%c0_8, %c0_9, %c0_10, %c0_11] : memref<1x1x8x8xbf16, #tpu.memory_space<vmem>>, vector<1x1x8x8xbf16>
    %8 = vector.shape_cast %7 : vector<1x1x8x8xbf16> to vector<8x8xbf16>
    %c0_12 = arith.constant 0 : index
    %c0_13 = arith.constant 0 : index
    %c0_14 = arith.constant 0 : index
    %9 = vector.load %arg7[%c0_12, %c0_13, %c0_14] : memref<1x1x8xf32, #tpu.memory_space<vmem>>, vector<1x1x8xf32>
    %10 = vector.shape_cast %9 : vector<1x1x8xf32> to vector<1x8xf32>
    %cst = arith.constant dense<0.000000e+00> : vector<8x8xf32>
    %11 = tpu.matmul %4, %6, %cst {dimension_numbers = #tpu.dot_dimension_numbers<[1], [1], [0], [0], [0, 0, 1, 0], [], []>} : vector<8x8xbf16>, vector<8x8xbf16>, vector<8x8xf32> -> vector<8x8xf32>
    %12 = vector.broadcast %10 : vector<1x8xf32> to vector<8x8xf32>
    %13 = arith.addf %11, %12 : vector<8x8xf32>
    %c0_15 = arith.constant 0 : index
    %c0_16 = arith.constant 0 : index
    %14 = vector.load %arg9[%c0_15, %c0_16] : memref<8x1xf32, #tpu.memory_space<vmem>>, vector<8x1xf32>
    %cst_17 = arith.constant dense<0xFF800000> : vector<8xf32>
    %15 = vector.multi_reduction <maximumf>, %13, %cst_17 [1] : vector<8x8xf32> to vector<8xf32>
    %16 = vector.shape_cast %15 : vector<8xf32> to vector<8x1xf32>
    %17 = arith.maximumf %14, %16 : vector<8x1xf32>
    %18 = arith.subf %14, %17 : vector<8x1xf32>
    %19 = math.exp %18 : vector<8x1xf32>
    %20 = vector.broadcast %17 : vector<8x1xf32> to vector<8x8xf32>
    %21 = arith.subf %13, %20 : vector<8x8xf32>
    %22 = math.exp %21 : vector<8x8xf32>
    %c0_18 = arith.constant 0 : index
    %c0_19 = arith.constant 0 : index
    %23 = vector.load %arg10[%c0_18, %c0_19] : memref<8x1xf32, #tpu.memory_space<vmem>>, vector<8x1xf32>
    %24 = arith.mulf %19, %23 : vector<8x1xf32>
    %cst_20 = arith.constant dense<0.000000e+00> : vector<8xf32>
    %25 = vector.multi_reduction <add>, %22, %cst_20 [1] : vector<8x8xf32> to vector<8xf32>
    %26 = vector.shape_cast %25 : vector<8xf32> to vector<8x1xf32>
    %27 = arith.addf %24, %26 : vector<8x1xf32>
    %c0_21 = arith.constant 0 : index
    %c0_22 = arith.constant 0 : index
    %28 = vector.load %arg10[%c0_21, %c0_22] : memref<8x1xf32, #tpu.memory_space<vmem>>, vector<8x1xf32>
    tpu.vector_store %arg10[%c0_21, %c0_22], %27 {strides = array<i32>} : memref<8x1xf32, #tpu.memory_space<vmem>>, vector<8x1xf32>,
    %c0_23 = arith.constant 0 : index
    %c0_24 = arith.constant 0 : index
    %29 = vector.load %arg11[%c0_23, %c0_24] : memref<8x8xf32, #tpu.memory_space<vmem>>, vector<8x8xf32>
    %30 = vector.broadcast %19 : vector<8x1xf32> to vector<8x8xf32>
    %31 = arith.mulf %30, %29 : vector<8x8xf32>
    %32 = arith.truncf %22 : vector<8x8xf32> to vector<8x8xbf16>
    %cst_25 = arith.constant dense<0.000000e+00> : vector<8x8xf32>
    %33 = tpu.matmul %32, %8, %cst_25 {dimension_numbers = #tpu.dot_dimension_numbers<[1], [0], [0], [1], [0, 0, 1, 1], [], []>} : vector<8x8xbf16>, vector<8x8xbf16>, vector<8x8xf32> -> vector<8x8xf32>
    %34 = arith.addf %31, %33 : vector<8x8xf32>
    %c0_26 = arith.constant 0 : index
    %c0_27 = arith.constant 0 : index
    %35 = vector.load %arg11[%c0_26, %c0_27] : memref<8x8xf32, #tpu.memory_space<vmem>>, vector<8x8xf32>
    tpu.vector_store %arg11[%c0_26, %c0_27], %34 {strides = array<i32>} : memref<8x8xf32, #tpu.memory_space<vmem>>, vector<8x8xf32>,
    %c0_28 = arith.constant 0 : index
    %c0_29 = arith.constant 0 : index
    %36 = vector.load %arg9[%c0_28, %c0_29] : memref<8x1xf32, #tpu.memory_space<vmem>>, vector<8x1xf32>
    tpu.vector_store %arg9[%c0_28, %c0_29], %17 {strides = array<i32>} : memref<8x1xf32, #tpu.memory_space<vmem>>, vector<8x1xf32>,
    %c0_i32_30 = arith.constant 0 : i32
    %37 = arith.cmpi eq, %arg3, %c0_i32_30 : i32
    %38 = arith.extui %37 : i1 to i32
    %c0_i32_31 = arith.constant 0 : i32
    %39 = arith.cmpi ne, %38, %c0_i32_31 : i32
    scf.if %39 {
      %c0_32 = arith.constant 0 : index
      %c0_33 = arith.constant 0 : index
      %40 = vector.load %arg11[%c0_32, %c0_33] : memref<8x8xf32, #tpu.memory_space<vmem>>, vector<8x8xf32>
      %c0_34 = arith.constant 0 : index
      %c0_35 = arith.constant 0 : index
      %41 = vector.load %arg10[%c0_34, %c0_35] : memref<8x1xf32, #tpu.memory_space<vmem>>, vector<8x1xf32>
      %42 = vector.broadcast %41 : vector<8x1xf32> to vector<8x8xf32>
      %43 = arith.divf %40, %42 : vector<8x8xf32>
      %c0_36 = arith.constant 0 : index
      %c0_37 = arith.constant 0 : index
      %c0_38 = arith.constant 0 : index
      %c0_39 = arith.constant 0 : index
      %44 = vector.load %arg8[%c0_36, %c0_37, %c0_38, %c0_39] : memref<1x1x8x8xf32, #tpu.memory_space<vmem>>, vector<1x1x8x8xf32>
      %45 = vector.shape_cast %44 : vector<1x1x8x8xf32> to vector<8x8xf32>
      %46 = vector.shape_cast %43 : vector<8x8xf32> to vector<1x1x8x8xf32>
      tpu.vector_store %arg8[%c0_36, %c0_37, %c0_38, %c0_39], %46 {strides = array<i32>} : memref<1x1x8x8xf32, #tpu.memory_space<vmem>>, vector<1x1x8x8xf32>,
    } else {
    }
    return
  }
  func.func @transform_0(%arg0: i32, %arg1: i32, %arg2: i32, %arg3: i32) -> (i32, i32, i32, i32) {
    %c0_i32 = arith.constant 0 : i32
    %c0_i32_0 = arith.constant 0 : i32
    return %arg0, %arg1, %arg2, %c0_i32 : i32, i32, i32, i32
  }
  func.func @transform_1(%arg0: i32, %arg1: i32, %arg2: i32, %arg3: i32) -> (i32, i32, i32, i32) {
    %c0_i32 = arith.constant 0 : i32
    %c0_i32_0 = arith.constant 0 : i32
    return %arg0, %arg1, %arg3, %c0_i32 : i32, i32, i32, i32
  }
  func.func @transform_2(%arg0: i32, %arg1: i32, %arg2: i32, %arg3: i32) -> (i32, i32, i32, i32) {
    %c0_i32 = arith.constant 0 : i32
    %c0_i32_0 = arith.constant 0 : i32
    return %arg0, %arg1, %arg3, %c0_i32 : i32, i32, i32, i32
  }
  func.func @transform_3(%arg0: i32, %arg1: i32, %arg2: i32, %arg3: i32) -> (i32, i32, i32) {
    %c0_i32 = arith.constant 0 : i32
    %c0_i32_0 = arith.constant 0 : i32
    return %arg0, %c0_i32, %arg3 : i32, i32, i32
  }
  func.func @transform_4(%arg0: i32, %arg1: i32, %arg2: i32, %arg3: i32) -> (i32, i32, i32, i32) {
    %c0_i32 = arith.constant 0 : i32
    %c0_i32_0 = arith.constant 0 : i32
    return %arg0, %arg1, %arg2, %c0_i32 : i32, i32, i32, i32
  }
}

</mosaic_0001>

<llo_original>
// kernel: tpu_custom_call.1
$region0: #{tpu_custom_call.1}
  #allocation0 [shape = 'u32[]', space=smem, size = 0x4, offset = 0x4, fixed_abs, tag = 'smem constant byte address 0x4 - core index']
  #allocation1 [shape = 'u32[144,128]{1,0:T(1,128)}', space=vmem, size = 0x12000, scoped, tag = 'internal scratch']
  #allocation2 [shape = 'f32[8,1]{1,0:T(8,128)}', space=vmem, size = 0x1000, scoped, tag = 'scratch operand']
  #allocation3 [shape = 'f32[8,1]{1,0:T(8,128)}', space=vmem, size = 0x1000, scoped, tag = 'scratch operand']
  #allocation4 [shape = 'f32[8,8]{1,0:T(8,128)}', space=vmem, size = 0x1000, scoped, tag = 'scratch operand']
  %s0 = inlined_call_operand.hbm [shape: bf16[2,4,8,8], index: 0, kind: input, shape index: {}]
  %s1 = inlined_call_operand.hbm [shape: bf16[2,4,8,8], index: 1, kind: input, shape index: {}]
  %s2 = inlined_call_operand.hbm [shape: bf16[2,4,8,8], index: 2, kind: input, shape index: {}]
  %s3 = inlined_call_operand.vmem [shape: f32[2,1,8], index: 3, kind: input, shape index: {}]
  %s4 = inlined_call_operand.hbm [shape: f32[2,4,8,8], index: 4, kind: output, shape index: {}]
  %s5 = sld [smem:[#allocation0]]
  $region69: #{tpu_custom_call.1} parent=0
    _
  %s7 = ssub.s32 1, %s5
  %s8 = scalar_select 0, %s7, %s5
  $region1: #{tpu_custom_call.1} parent=0
    #allocation5 [shape = 'u8[4096]{0}', space=vmem, size = 0x1000, scoped, tag = 'input window, operand 0']
    #allocation6 [shape = 's32[2]{0}', space=sflag, size = 0x8, scoped, tag = 'scoped memory for tpu_custom_call.1']
    #allocation7 [shape = 's32[2]{0}', space=sflag, size = 0x8, scoped, tag = 'scoped memory for tpu_custom_call.1']
    #allocation8 [shape = 'u8[4096]{0}', space=vmem, size = 0x1000, scoped, tag = 'input window, operand 1']
    #allocation9 [shape = 's32[2]{0}', space=sflag, size = 0x8, scoped, tag = 'scoped memory for tpu_custom_call.1']
    #allocation10 [shape = 'u8[4096]{0}', space=vmem, size = 0x1000, scoped, tag = 'input window, operand 2']
    #allocation11 [shape = 'u8[8192]{0}', space=vmem, size = 0x2000, scoped, tag = 'output window, operand 0']
    %9 = vsyncpa [#allocation6], 0
    %s10 = scalar_lea.sflag [#allocation6], 1
    %11 = vsyncpa %s10, 0
    %12 = vsyncpa [#allocation9], 0
    %s13 = scalar_lea.sflag [#allocation9], 1
    %14 = vsyncpa %s13, 0
    %15 = vsyncpa [#allocation7], 0
    %s16 = scalar_lea.sflag [#allocation7], 1
    %17 = vsyncpa %s16, 0
    loop: start=0, step=1, limit=10
    $region2: #{tpu_custom_call.1} parent=1 // loop_pre_header
      _
    $region3: #{tpu_custom_call.1} parent=1 // loop_header
      %s19 = sphi 0, %s23
      %p20 = scmp.ge.s32.totalorder %s19, 10
      %s26 = sphi 0, %s52
      %s27 = sphi 0, %s48
      %s28 = sphi 0, %s44
      %s29 = sphi 0, %s40
      %s30 = sphi 0, %s26
      %s31 = sphi 0, %s27
      %s32 = sphi 0, %s28
      %s33 = sphi 0, %s29
      %s34 = sphi 0, %s30
      %s35 = sphi 0, %s31
      %s36 = sphi 0, %s32
      %s37 = sphi 0, %s33
      %s59 = sphi 0, %s61
      %s62 = sphi 0, %s59
      %s63 = sphi 0, %s62
      %s79 = sphi 0, %s63
      %s89 = sphi 0, %s91
      %s92 = sphi 0, %s89
      %s93 = sphi 0, %s92
      %s109 = sphi 0, %s93
      %s119 = sphi 0, %s121
      %s122 = sphi 0, %s119
      %s123 = sphi 0, %s122
      %s139 = sphi 0, %s123
      %s147 = sphi 0, %s149
      %s150 = sphi 0, %s147
      %s151 = sphi 0, %s150
      %s167 = sphi 0, %s151
      %s177 = sphi 0, %s179
      %s180 = sphi 0, %s177
      %s181 = sphi 0, %s180
      %s197 = sphi 0, %s181
    $region4: #{tpu_custom_call.1} parent=1 // loop_header_branch
      %22 = sbr.rel (%p20) target = $region8
    $region5: #{tpu_custom_call.1} parent=1 // loop_body
      %s24 = ssub.s32 %s19, 1
      %s25 = ssub.s32 %s19, 2
      %s38 = sadd.s32 1, %s29
      %p39 = scmp.ge.s32.totalorder %s38, 1
      %s40 = scalar_select %p39, 0, %s38
      %s41 = sadd.s32 1, %s28
      %s42 = scalar_select %p39, %s41, %s28
      %p43 = scmp.ge.s32.totalorder %s42, 1
      %s44 = scalar_select %p43, 0, %s42
      %s45 = sadd.s32 1, %s27
      %s46 = scalar_select %p43, %s45, %s27
      %p47 = scmp.ge.s32.totalorder %s46, 4
      %s48 = scalar_select %p47, 0, %s46
      %s49 = sadd.s32 1, %s26
      %s50 = scalar_select %p47, %s49, %s26
      %p51 = scmp.ge.s32.totalorder %s50, 2
      %s52 = scalar_select %p51, 0, %s50
      %s53 = ssub.s32 %s26, %s52
      %s54 = ssub.s32 %s27, %s48
      %s55 = sor.u32 %s53, %s54
      %s56 = ssub.s32 %s28, %s44
      %s57 = sor.u32 %s55, %s56
      %p58 = scmp.eq.s32.totalorder %s57, 0
      %s60 = sadd.s32 %s59, 1
      %s61 = scalar_select %p58, %s59, %s60
      %p64 = pneg %p58
      %p65 = scmp.eq.s32.totalorder %s19, 7
      %p66 = por %p64, %p65
      %p67 = scmp.ne.s32.totalorder %s59, %s62
      %p68 = scmp.eq.s32.totalorder %s19, 0
      %p69 = por %p67, %p68
      %p70 = scmp.ne.s32.totalorder %s59, %s62
      %p71 = scmp.eq.s32.totalorder %s24, 7
      %p72 = por %p70, %p71
      %p73 = scmp.ne.s32.totalorder %s62, %s63
      %p74 = scmp.eq.s32.totalorder %s24, 0
      %p75 = por %p73, %p74
      %p76 = scmp.ne.s32.totalorder %s62, %s63
      %p77 = scmp.eq.s32.totalorder %s25, 7
      %p78 = por %p76, %p77
      %p80 = scmp.ne.s32.totalorder %s63, %s79
      %p81 = scmp.eq.s32.totalorder %s25, 0
      %p82 = por %p80, %p81
      %s83 = ssub.s32 %s26, %s52
      %s84 = ssub.s32 %s27, %s48
      %s85 = sor.u32 %s83, %s84
      %s86 = ssub.s32 %s29, %s40
      %s87 = sor.u32 %s85, %s86
      %p88 = scmp.eq.s32.totalorder %s87, 0
      %s90 = sadd.s32 %s89, 1
      %s91 = scalar_select %p88, %s89, %s90
      %p94 = pneg %p88
      %p95 = scmp.eq.s32.totalorder %s19, 7
      %p96 = por %p94, %p95
      %p97 = scmp.ne.s32.totalorder %s89, %s92
      %p98 = scmp.eq.s32.totalorder %s19, 0
      %p99 = por %p97, %p98
      %p100 = scmp.ne.s32.totalorder %s89, %s92
      %p101 = scmp.eq.s32.totalorder %s24, 7
      %p102 = por %p100, %p101
      %p103 = scmp.ne.s32.totalorder %s92, %s93
      %p104 = scmp.eq.s32.totalorder %s24, 0
      %p105 = por %p103, %p104
      %p106 = scmp.ne.s32.totalorder %s92, %s93
      %p107 = scmp.eq.s32.totalorder %s25, 7
      %p108 = por %p106, %p107
      %p110 = scmp.ne.s32.totalorder %s93, %s109
      %p111 = scmp.eq.s32.totalorder %s25, 0
      %p112 = por %p110, %p111
      %s113 = ssub.s32 %s26, %s52
      %s114 = ssub.s32 %s27, %s48
      %s115 = sor.u32 %s113, %s114
      %s116 = ssub.s32 %s29, %s40
      %s117 = sor.u32 %s115, %s116
      %p118 = scmp.eq.s32.totalorder %s117, 0
      %s120 = sadd.s32 %s119, 1
      %s121 = scalar_select %p118, %s119, %s120
      %p124 = pneg %p118
      %p125 = scmp.eq.s32.totalorder %s19, 7
      %p126 = por %p124, %p125
      %p127 = scmp.ne.s32.totalorder %s119, %s122
      %p128 = scmp.eq.s32.totalorder %s19, 0
      %p129 = por %p127, %p128
      %p130 = scmp.ne.s32.totalorder %s119, %s122
      %p131 = scmp.eq.s32.totalorder %s24, 7
      %p132 = por %p130, %p131
      %p133 = scmp.ne.s32.totalorder %s122, %s123
      %p134 = scmp.eq.s32.totalorder %s24, 0
      %p135 = por %p133, %p134
      %p136 = scmp.ne.s32.totalorder %s122, %s123
      %p137 = scmp.eq.s32.totalorder %s25, 7
      %p138 = por %p136, %p137
      %p140 = scmp.ne.s32.totalorder %s123, %s139
      %p141 = scmp.eq.s32.totalorder %s25, 0
      %p142 = por %p140, %p141
      %s143 = ssub.s32 %s26, %s52
      %s144 = ssub.s32 %s29, %s40
      %s145 = sor.u32 %s143, %s144
      %p146 = scmp.eq.s32.totalorder %s145, 0
      %s148 = sadd.s32 %s147, 1
      %s149 = scalar_select %p146, %s147, %s148
      %p152 = pneg %p146
      %p153 = scmp.eq.s32.totalorder %s19, 7
      %p154 = por %p152, %p153
      %p155 = scmp.ne.s32.totalorder %s147, %s150
      %p156 = scmp.eq.s32.totalorder %s19, 0
      %p157 = por %p155, %p156
      %p158 = scmp.ne.s32.totalorder %s147, %s150
      %p159 = scmp.eq.s32.totalorder %s24, 7
      %p160 = por %p158, %p159
      %p161 = scmp.ne.s32.totalorder %s150, %s151
      %p162 = scmp.eq.s32.totalorder %s24, 0
      %p163 = por %p161, %p162
      %p164 = scmp.ne.s32.totalorder %s150, %s151
      %p165 = scmp.eq.s32.totalorder %s25, 7
      %p166 = por %p164, %p165
      %p168 = scmp.ne.s32.totalorder %s151, %s167
      %p169 = scmp.eq.s32.totalorder %s25, 0
      %p170 = por %p168, %p169
      %s171 = ssub.s32 %s26, %s52
      %s172 = ssub.s32 %s27, %s48
      %s173 = sor.u32 %s171, %s172
      %s174 = ssub.s32 %s28, %s44
      %s175 = sor.u32 %s173, %s174
      %p176 = scmp.eq.s32.totalorder %s175, 0
      %s178 = sadd.s32 %s177, 1
      %s179 = scalar_select %p176, %s177, %s178
      %p182 = pneg %p176
      %p183 = scmp.eq.s32.totalorder %s19, 7
      %p184 = por %p182, %p183
      %p185 = scmp.ne.s32.totalorder %s177, %s180
      %p186 = scmp.eq.s32.totalorder %s19, 0
      %p187 = por %p185, %p186
      %p188 = scmp.ne.s32.totalorder %s177, %s180
      %p189 = scmp.eq.s32.totalorder %s24, 7
      %p190 = por %p188, %p189
      %p191 = scmp.ne.s32.totalorder %s180, %s181
      %p192 = scmp.eq.s32.totalorder %s24, 0
      %p193 = por %p191, %p192
      %p194 = scmp.ne.s32.totalorder %s180, %s181
      %p195 = scmp.eq.s32.totalorder %s25, 7
      %p196 = por %p194, %p195
      %p198 = scmp.ne.s32.totalorder %s181, %s197
      %p199 = scmp.eq.s32.totalorder %s25, 0
      %p200 = por %p198, %p199
      %p201 = scmp.le.s32.totalorder 1, %s19
      %p202 = scmp.lt.s32.totalorder %s19, 9
      %p203 = pnand %p201, %p202
      %p204 = pneg %p203
      // Predicated region
      $region9: #{tpu_custom_call.1} parent=5 // pred_check
        _
      $region10: #{tpu_custom_call.1} parent=5 // pred_check_branch
        %206 = sbr.rel (%p203) target = $region12
      $region11: #{tpu_custom_call.1} parent=5 // pred_region
        %s207 = ssub.s32 %s19, 1
      $region12: #{tpu_custom_call.1} parent=5 // pred_fallthru
        _
      %p208 = scmp.lt.s32.totalorder %s19, 8
      // Predicated region
      $region13: #{tpu_custom_call.1} parent=5 // pred_check
        %p209 = pneg %p208
      $region14: #{tpu_custom_call.1} parent=5 // pred_check_branch
        %211 = sbr.rel (%p209) target = $region16
      $region15: #{tpu_custom_call.1} parent=5 // pred_region
        // Predicated region
        $region17: #{tpu_custom_call.1} parent=15 // pred_check
          %p212 = pneg %p69
        $region18: #{tpu_custom_call.1} parent=15 // pred_check_branch
          %214 = sbr.rel (%p212) target = $region20
        $region19: #{tpu_custom_call.1} parent=15 // pred_region
          %s215 = sand.u32 %s59, 1
          %s216 = scalar_lea.sflag [#allocation6], %s215
          %s217 = sand.u32 %s59, 1
          %s218 = smul.addr %s217, 4
          %s219 = scalar_lea.vmem [#allocation5], %s218
          %s221 = ssub.s32 64, 64
          %222 = vsyncadd %s216, %s221
          %s223 = sadd.s32 %s28, %s27
          %s224 = smul.addr %s26, 4
          %s225 = sadd.s32 %s223, %s224
          %s226 = smul.addr %s225, 64
          %s227 = scalar_lea.hbm %s0, %s226
          %s229 = sshll.u32 %s219, 4
          %s230 = int_to_ptr.vmem [resolvable:$true] %s229
          %232 = dma.hbm_to_vmem [thread:$0]  %s227, 64, %s230, %s216
        $region20: #{tpu_custom_call.1} parent=15 // pred_fallthru
          _
        // Predicated region
        $region21: #{tpu_custom_call.1} parent=15 // pred_check
          %p233 = pneg %p99
        $region22: #{tpu_custom_call.1} parent=15 // pred_check_branch
          %235 = sbr.rel (%p233) target = $region24
        $region23: #{tpu_custom_call.1} parent=15 // pred_region
          %s236 = sand.u32 %s19, 1
          %s237 = scalar_lea.sflag [#allocation9], %s236
          %s238 = sand.u32 %s89, 1
          %s239 = smul.addr %s238, 4
          %s240 = scalar_lea.vmem [#allocation8], %s239
          %s242 = ssub.s32 64, 64
          %243 = vsyncadd %s237, %s242
          %s244 = sadd.s32 %s29, %s27
          %s245 = smul.addr %s26, 4
          %s246 = sadd.s32 %s244, %s245
          %s247 = smul.addr %s246, 64
          %s248 = scalar_lea.hbm %s1, %s247
          %s250 = sshll.u32 %s240, 4
          %s251 = int_to_ptr.vmem [resolvable:$true] %s250
          %253 = dma.hbm_to_vmem [thread:$0]  %s248, 64, %s251, %s237
        $region24: #{tpu_custom_call.1} parent=15 // pred_fallthru
          _
        // Predicated region
        $region25: #{tpu_custom_call.1} parent=15 // pred_check
          %p254 = pneg %p129
        $region26: #{tpu_custom_call.1} parent=15 // pred_check_branch
          %256 = sbr.rel (%p254) target = $region28
        $region27: #{tpu_custom_call.1} parent=15 // pred_region
          %s257 = sand.u32 %s19, 1
          %s258 = scalar_lea.sflag [#allocation9], %s257
          %s259 = sand.u32 %s119, 1
          %s260 = smul.addr %s259, 4
          %s261 = scalar_lea.vmem [#allocation10], %s260
          %s263 = ssub.s32 64, 64
          %264 = vsyncadd %s258, %s263
          %s265 = sadd.s32 %s29, %s27
          %s266 = smul.addr %s26, 4
          %s267 = sadd.s32 %s265, %s266
          %s268 = smul.addr %s267, 64
          %s269 = scalar_lea.hbm %s2, %s268
          %s271 = sshll.u32 %s261, 4
          %s272 = int_to_ptr.vmem [resolvable:$true] %s271
          %274 = dma.hbm_to_vmem [thread:$0]  %s269, 64, %s272, %s258
        $region28: #{tpu_custom_call.1} parent=15 // pred_fallthru
          _
        // Predicated region
        $region29: #{tpu_custom_call.1} parent=15 // pred_check
          %p275 = pneg %p157
        $region30: #{tpu_custom_call.1} parent=15 // pred_check_branch
          %277 = sbr.rel (%p275) target = $region32
        $region31: #{tpu_custom_call.1} parent=15 // pred_region
          %p278 = scmp.lt.s32.totalorder %s26, 1
          %s279 = scalar_select %p278, %s26, 1
          %p280 = scmp.lt.s32.totalorder %s29, 0
          %s281 = scalar_select %p280, %s29, 0
          %s282 = sadd.s32 %s281, %s279
          %s283 = scalar_lea.vmem %s3, %s282
        $region32: #{tpu_custom_call.1} parent=15 // pred_fallthru
          _
      $region16: #{tpu_custom_call.1} parent=5 // pred_fallthru
        _
      %p284 = scmp.le.s32.totalorder 1, %s19
      %p285 = scmp.lt.s32.totalorder %s19, 9
      %p286 = pnand %p284, %p285
      %p287 = pneg %p286
      // Predicated region
      $region33: #{tpu_custom_call.1} parent=5 // pred_check
        _
      $region34: #{tpu_custom_call.1} parent=5 // pred_check_branch
        %289 = sbr.rel (%p286) target = $region36
      $region35: #{tpu_custom_call.1} parent=5 // pred_region
        %s290 = ssub.s32 %s19, 1
        %s291 = sand.u32 %s62, 1
        %s292 = scalar_lea.sflag [#allocation6], %s291
        %s293 = sand.u32 %s62, 1
        %s294 = smul.addr %s293, 4
        %s295 = scalar_lea.vmem [#allocation5], %s294
        // Predicated region
        $region37: #{tpu_custom_call.1} parent=35 // pred_check
          %p296 = pneg %p75
        $region38: #{tpu_custom_call.1} parent=35 // pred_check_branch
          %298 = sbr.rel (%p296) target = $region40
        $region39: #{tpu_custom_call.1} parent=35 // pred_region
          %299 = dma.done %s292, 64
        $region40: #{tpu_custom_call.1} parent=35 // pred_fallthru
          _
        %s300 = sand.u32 %s24, 1
        %s301 = scalar_lea.sflag [#allocation9], %s300
        %s302 = sand.u32 %s92, 1
        %s303 = smul.addr %s302, 4
        %s304 = scalar_lea.vmem [#allocation8], %s303
        // Predicated region
        $region41: #{tpu_custom_call.1} parent=35 // pred_check
          %p305 = pneg %p105
        $region42: #{tpu_custom_call.1} parent=35 // pred_check_branch
          %307 = sbr.rel (%p305) target = $region44
        $region43: #{tpu_custom_call.1} parent=35 // pred_region
          %308 = dma.done %s301, 64
        $region44: #{tpu_custom_call.1} parent=35 // pred_fallthru
          _
        %s309 = sand.u32 %s24, 1
        %s310 = scalar_lea.sflag [#allocation9], %s309
        %s311 = sand.u32 %s122, 1
        %s312 = smul.addr %s311, 4
        %s313 = scalar_lea.vmem [#allocation10], %s312
        // Predicated region
        $region45: #{tpu_custom_call.1} parent=35 // pred_check
          %p314 = pneg %p135
        $region46: #{tpu_custom_call.1} parent=35 // pred_check_branch
          %316 = sbr.rel (%p314) target = $region48
        $region47: #{tpu_custom_call.1} parent=35 // pred_region
          %317 = dma.done %s310, 64
        $region48: #{tpu_custom_call.1} parent=35 // pred_fallthru
          _
        %s318 = sand.u32 %s62, 1
        %s319 = scalar_lea.sflag [#allocation6], %s318
        %s320 = sand.u32 %s62, 1
        %s321 = smul.addr %s320, 4
        %s322 = scalar_lea.vmem [#allocation5], %s321
        %p323 = pneg %p75
        %p324 = pneg %p72
        %s325 = sand.u32 %s24, 1
        %s326 = scalar_lea.sflag [#allocation9], %s325
        %s327 = sand.u32 %s92, 1
        %s328 = smul.addr %s327, 4
        %s329 = scalar_lea.vmem [#allocation8], %s328
        %p330 = pneg %p105
        %p331 = pneg %p102
        %s332 = sand.u32 %s24, 1
        %s333 = scalar_lea.sflag [#allocation9], %s332
        %s334 = sand.u32 %s122, 1
        %s335 = smul.addr %s334, 4
        %s336 = scalar_lea.vmem [#allocation10], %s335
        %p337 = pneg %p135
        %p338 = pneg %p132
        %p339 = scmp.lt.s32.totalorder %s30, 1
        %s340 = scalar_select %p339, %s30, 1
        %p341 = scmp.lt.s32.totalorder %s33, 0
        %s342 = scalar_select %p341, %s33, 0
        %s343 = sadd.s32 %s342, %s340
        %s344 = scalar_lea.vmem %s3, %s343
        %p345 = pneg %p163
        %p346 = pneg %p160
        %p347 = pneg %p193
        %p348 = pneg %p190
        %s349 = sand.u32 %s180, 1
        %s350 = scalar_lea.sflag [#allocation7], %s349
        %s351 = sand.u32 %s180, 1
        %s352 = smul.addr %s351, 8
        %s353 = scalar_lea.vmem [#allocation11], %s352
        %p354 = scmp.lt.s32.totalorder %s30, 1
        %s355 = scalar_select %p354, %s30, 1
        %p356 = scmp.lt.s32.totalorder %s33, 0
        %s357 = scalar_select %p356, %s33, 0
        %s358 = sadd.s32 %s357, %s355
        %s359 = scalar_lea.vmem %s3, %s358
        %p361 = scmp.eq.s32.totalorder %s33, 0
        // Predicated region
        $region49: #{tpu_custom_call.1} parent=35 // pred_check
          %p362 = pneg %p361
        $region50: #{tpu_custom_call.1} parent=35 // pred_check_branch
          %364 = sbr.rel (%p362) target = $region52
        $region51: #{tpu_custom_call.1} parent=35 // pred_region
          %vm365 = vcmask 7168
          %366 = vst.msk [vmem:[#allocation2] sm:$0xff] %vm365, -1e+30
          %367 = vst.msk [vmem:[#allocation3] sm:$0xff] %vm365, 0.0
          %vm368 = vcmask 64512
          %369 = vst.msk [vmem:[#allocation4] sm:$0xff] %vm368, 0.0
        $region52: #{tpu_custom_call.1} parent=35 // pred_fallthru
          _
        %v370 = vld [vmem:[%s295] sm:$0xf]
        %v371 = vld [vmem:[%s304] sm:$0xf]
        %v372 = vld [vmem:[%s313] sm:$0xf]
        %v373 = vld [vmem:[%s359] sm:$0x1]
        %v375 = vlaneseq
        %v376 = vshrl.u32 %v375, 7
        %v377 = vsub.s32 0, %v376
        %v378 = vrot.slane %v373, %v377
        %vm380 = vcmask 64512
        %v382 = vsel %vm380, %v370, 0
        %v385 = vsel %vm380, %v371, 0
        %387 = vmatprep.subr.bf16.mxu0 0
        %388 = vmatpush1.bf16.xpose.msra.mxu0 %v385
        %389 = vmatprep.subr.bf16.mxu0 0
        %390 = vmatpush1.bf16.xpose.msra.mxu0 0
        %391 = vmatprep.subr.bf16.mxu0 0
        %392 = vmatpush1.bf16.xpose.msra.mxu0 0
        %393 = vmatprep.subr.bf16.mxu0 0
        %394 = vmatpush1.bf16.xpose.msra.mxu0 0
        %395 = vmatprep.subr.bf16.mxu0 0
        %396 = vmatpush1.bf16.xpose.msra.mxu0 0
        %397 = vmatprep.subr.bf16.mxu0 0
        %398 = vmatpush1.bf16.xpose.msra.mxu0 0
        %399 = vmatprep.subr.bf16.mxu0 0
        %400 = vmatpush1.bf16.xpose.msra.mxu0 0
        %401 = vmatprep.subr.bf16.mxu0 0
        %402 = vmatpush1.bf16.xpose.msra.mxu0 0
        %403 = vmatprep.subr.bf16.mxu0 0
        %404 = vmatpush1.bf16.xpose.msra.mxu0 0
        %405 = vmatprep.subr.bf16.mxu0 0
        %406 = vmatpush1.bf16.xpose.msra.mxu0 0
        %407 = vmatprep.subr.bf16.mxu0 0
        %408 = vmatpush1.bf16.xpose.msra.mxu0 0
        %409 = vmatprep.subr.bf16.mxu0 0
        %410 = vmatpush1.bf16.xpose.msra.mxu0 0
        %411 = vmatprep.subr.bf16.mxu0 0
        %412 = vmatpush1.bf16.xpose.msra.mxu0 0
        %413 = vmatprep.subr.bf16.mxu0 0
        %414 = vmatpush1.bf16.xpose.msra.mxu0 0
        %415 = vmatprep.subr.bf16.mxu0 0
        %416 = vmatpush1.bf16.xpose.msra.mxu0 0
        %417 = vmatprep.subr.bf16.mxu0 0
        %418 = vmatpush1.bf16.xpose.msra.mxu0 0
        %419 = vmatprep.mubr.bf16.mxu0 0
        %420 = vmatmul.mubr.bf16.gmra.mrb[0].mxu0 %v382
        %v421 = vpop.f32.mrb[0].mxu0
        %v422 = vadd.f32 %v378, %v421
        %v423 = vpop.f32.mrb[0].mxu0
        %v424 = vpop.f32.mrb[0].mxu0
        %v425 = vpop.f32.mrb[0].mxu0
        %426 = vdwg.mxu0
        %v427 = vld [vmem:[#allocation2] sm:$0xff]
        %v428 = vsel %vm380, %v422, -inf
        %429 = vmax.xlane.f32.xlu0 %v428
        %v430 = vpop.xlane.xlu0 %429
        %v431 = vmax.f32 %v427, %v430
        %v432 = vsub.f32 %v427, %v431
        %v433 = vmul.f32 %v432, 1.442695
        %v434 = vpow.pop %v433
        %436 = vset.pattern.permute.xlu0 0
        %437 = vperm.xlu0 %436, %v431
        %v438 = vpop.permute.xlu0 %437
        %v440 = vsub.f32 %v422, %v438
        %v441 = vmul.f32 %v440, 1.442695
        %v442 = vpow.pop %v441
        %v443 = vld [vmem:[#allocation3] sm:$0xff]
        %v444 = vmul.f32 %v434, %v443
        %v445 = vsel %vm380, %v442, 0.0
        %446 = vadd.xlane.f32.xlu0 %v445
        %v447 = vpop.xlane.xlu0 %446
        %v448 = vadd.f32 %v444, %v447
        %vm449 = vcmask 7168
        %450 = vst.msk [vmem:[#allocation3] sm:$0xff] %vm449, %v448
        %v451 = vld [vmem:[#allocation4] sm:$0xff]
        %453 = vset.pattern.permute.xlu0 0
        %454 = vperm.xlu0 %453, %v434
        %v455 = vpop.permute.xlu0 %454
        %v457 = vmul.f32 %v455, %v451
        %v458 = vpack.c.bf16 %v442, %v442
        %v460 = vsel %vm380, %v458, 0
        %vm462 = vcmask 1043456
        %v464 = vsel %vm462, %v372, 0
        %466 = vmatprep.subr.bf16.mxu0 0
        %467 = vmatpush1.bf16.msra.mxu0 %v464
        %468 = vmatprep.subr.bf16.mxu0 0
        %469 = vmatpush1.bf16.msra.mxu0 0
        %470 = vmatprep.subr.bf16.mxu0 0
        %471 = vmatpush1.bf16.msra.mxu0 0
        %472 = vmatprep.subr.bf16.mxu0 0
        %473 = vmatpush1.bf16.msra.mxu0 0
        %474 = vmatprep.subr.bf16.mxu0 0
        %475 = vmatpush1.bf16.msra.mxu0 0
        %476 = vmatprep.subr.bf16.mxu0 0
        %477 = vmatpush1.bf16.msra.mxu0 0
        %478 = vmatprep.subr.bf16.mxu0 0
        %479 = vmatpush1.bf16.msra.mxu0 0
        %480 = vmatprep.subr.bf16.mxu0 0
        %481 = vmatpush1.bf16.msra.mxu0 0
        %482 = vmatprep.subr.bf16.mxu0 0
        %483 = vmatpush1.bf16.msra.mxu0 0
        %484 = vmatprep.subr.bf16.mxu0 0
        %485 = vmatpush1.bf16.msra.mxu0 0
        %486 = vmatprep.subr.bf16.mxu0 0
        %487 = vmatpush1.bf16.msra.mxu0 0
        %488 = vmatprep.subr.bf16.mxu0 0
        %489 = vmatpush1.bf16.msra.mxu0 0
        %490 = vmatprep.subr.bf16.mxu0 0
        %491 = vmatpush1.bf16.msra.mxu0 0
        %492 = vmatprep.subr.bf16.mxu0 0
        %493 = vmatpush1.bf16.msra.mxu0 0
        %494 = vmatprep.subr.bf16.mxu0 0
        %495 = vmatpush1.bf16.msra.mxu0 0
        %496 = vmatprep.subr.bf16.mxu0 0
        %497 = vmatpush1.bf16.msra.mxu0 0
        %498 = vmatprep.mubr.bf16.mxu0 0
        %499 = vmatmul.mubr.bf16.gmra.mrb[0].mxu0 %v460
        %v500 = vpop.f32.mrb[0].mxu0
        %v501 = vadd.f32 0.0, %v500
        %v502 = vpop.f32.mrb[0].mxu0
        %v503 = vpop.f32.mrb[0].mxu0
        %v504 = vpop.f32.mrb[0].mxu0
        %505 = vdwg.mxu0
        %v506 = vadd.f32 %v457, %v501
        %507 = vst.msk [vmem:[#allocation4] sm:$0xff] %vm380, %v506
        %508 = vst.msk [vmem:[#allocation2] sm:$0xff] %vm449, %v431
        // Predicated region
        $region53: #{tpu_custom_call.1} parent=35 // pred_check
          %p509 = pneg %p361
        $region54: #{tpu_custom_call.1} parent=35 // pred_check_branch
          %511 = sbr.rel (%p509) target = $region56
        $region55: #{tpu_custom_call.1} parent=35 // pred_region
          %v512 = vld [vmem:[#allocation4] sm:$0xff]
          %v513 = vld [vmem:[#allocation3] sm:$0xff]
          %515 = vset.pattern.permute.xlu0 0
          %516 = vperm.xlu0 %515, %v513
          %v517 = vpop.permute.xlu0 %516
          %v519 = vrcp.pop %v517
          %v520 = vmul.f32 %v512, %v519
          %521 = vst.msk [vmem:[%s353] sm:$0xff] %vm380, %v520
        $region56: #{tpu_custom_call.1} parent=35 // pred_fallthru
          _
        %s522 = sand.u32 %s180, 1
        %s523 = scalar_lea.sflag [#allocation7], %s522
        %s524 = sand.u32 %s180, 1
        %s525 = smul.addr %s524, 8
        %s526 = scalar_lea.vmem [#allocation11], %s525
        // Predicated region
        $region57: #{tpu_custom_call.1} parent=35 // pred_check
          %p527 = pneg %p190
        $region58: #{tpu_custom_call.1} parent=35 // pred_check_branch
          %529 = sbr.rel (%p527) target = $region60
        $region59: #{tpu_custom_call.1} parent=35 // pred_region
          %s531 = ssub.s32 128, 128
          %532 = vsyncadd %s523, %s531
          %s533 = sadd.s32 %s32, %s31
          %s534 = smul.addr %s30, 4
          %s535 = sadd.s32 %s533, %s534
          %s536 = smul.addr %s535, 128
          %s537 = scalar_lea.hbm %s4, %s536
          %s539 = sshll.u32 %s526, 4
          %s540 = int_to_ptr.vmem [resolvable:$true] %s539
          %542 = dma.vmem_to_hbm [thread:$0]  %s540, 128, %s537, %s523
        $region60: #{tpu_custom_call.1} parent=35 // pred_fallthru
          _
      $region36: #{tpu_custom_call.1} parent=5 // pred_fallthru
        _
      %p543 = scmp.le.s32.totalorder 2, %s19
      // Predicated region
      $region61: #{tpu_custom_call.1} parent=5 // pred_check
        %p544 = pneg %p543
      $region62: #{tpu_custom_call.1} parent=5 // pred_check_branch
        %546 = sbr.rel (%p544) target = $region64
      $region63: #{tpu_custom_call.1} parent=5 // pred_region
        %s547 = ssub.s32 %s19, 2
        // Predicated region
        $region65: #{tpu_custom_call.1} parent=63 // pred_check
          %p548 = pneg %p196
        $region66: #{tpu_custom_call.1} parent=63 // pred_check_branch
          %550 = sbr.rel (%p548) target = $region68
        $region67: #{tpu_custom_call.1} parent=63 // pred_region
          %s551 = sand.u32 %s181, 1
          %s552 = scalar_lea.sflag [#allocation7], %s551
          %s553 = sand.u32 %s181, 1
          %s554 = smul.addr %s553, 8
          %s555 = scalar_lea.vmem [#allocation11], %s554
          %556 = dma.done %s552, 128
        $region68: #{tpu_custom_call.1} parent=63 // pred_fallthru
          _
      $region64: #{tpu_custom_call.1} parent=5 // pred_fallthru
        _
    $region6: #{tpu_custom_call.1} parent=1 // loop_footer
      %s23 = sadd.s32 1, %s19
    $region7: #{tpu_custom_call.1} parent=1 // loop_footer_branch
      %18 = sbr.rel target = $region3
    $region8: #{tpu_custom_call.1} parent=1 // loop_exit
      _
    %557 = vsyncpa [#allocation6], 1
    %s558 = scalar_lea.sflag [#allocation6], 1
    %559 = vsyncpa %s558, 1
    %560 = vsyncpa [#allocation9], 1
    %s561 = scalar_lea.sflag [#allocation9], 1
    %562 = vsyncpa %s561, 1
    %563 = vsyncpa [#allocation7], 1
    %s564 = scalar_lea.sflag [#allocation7], 1
    %565 = vsyncpa %s564, 1

</llo_original>
